<compile_context>
chip_gen: v7x
topology: tpu7x:2x2x1
jax: 0.10.0
libtpu: 0.0.40
codegen_flags: <defaults>
</compile_context>

<pallas_src>
import functools

import jax
import jax.numpy as jnp
import numpy as np
from jax.experimental import pallas as pl
from jax.experimental.pallas import tpu as pltpu


def _dwconv_kernel(x_ref, w_ref, o_ref, *, K, stride, Hi, Gi):
    """One (batch, H-tile) grid step of the depthwise conv.

    x_ref: (1, S*Hi, S*Gi, L)  packed, padded input plane (resident per batch)
    w_ref: (K*K, L)            per-tap filter lane vectors (grid-resident)
    o_ref: (1, TH, Go, L)      packed output tile
    """
    _, TH, Go, L = o_ref.shape
    S = stride
    t = pl.program_id(1)
    h_base = pl.multiple_of(t * TH, TH)            # first output row of tile

    w_all = w_ref[...].astype(jnp.float32)         # all K*K taps, loaded once
    acc = jnp.zeros((TH, Go, L), jnp.float32)      # register-resident accumulator
    for kh in range(K):                            # fully unrolled static taps
        rh, qh = kh % S, kh // S
        for kw in range(K):
            rw, qw = kw % S, kw // S
            # Contiguous slices only: parity (rh, rw) picks the plane, the
            # tap offset is plain row/sublane addressing.
            patch = x_ref[0,
                          pl.ds(rh * Hi + qh + h_base, TH),
                          pl.ds(rw * Gi + qw, Go),
                          :].astype(jnp.float32)   # (TH, Go, L)
            acc = acc + patch * w_all[kh * K + kw]
    o_ref[0] = acc.astype(o_ref.dtype)


@functools.partial(jax.jit, static_argnames=("stride",))
def depthwise_conv2d(x, w, *, stride=1):
    """Depthwise conv2d. x: (N, C, H, W), w: (C, K, K).

    Matches nn.Conv2d(C, C, K, padding=(K-1)//2, stride=stride, groups=C,
    bias=False). NCHW in / NCHW out (PyTorch layout); a packed layout with
    channels (and packed output columns) on the lane axis is used internally.
    """
    N, C, H, W = x.shape
    Cw, K, K2 = w.shape
    assert Cw == C and K == K2
    S = int(stride)
    pad = (K - 1) // 2
    Hp, Wp = H + 2 * pad, W + 2 * pad
    Ho = (Hp - K) // S + 1
    Wo = (Wp - K) // S + 1

    # Lane packing factor: pack f output columns into the lane axis.
    f = 1
    for cand in range(max(1, min(128 // max(C, 1), Wo)), 0, -1):
        if Wo % cand == 0:
            f = cand
            break
    Go = Wo // f
    L = f * C
    Gi = Go - 1 + -(-K // S)      # input column slots per W-parity plane
    Hi = Ho - 1 + -(-K // S)      # input row slots per H-parity plane

    # Static gather indices mapping packed slots -> padded-plane coordinates.
    rows = (np.arange(S)[:, None] + np.arange(Hi)[None, :] * S).reshape(-1)
    cols = (np.arange(S)[:, None, None]
            + np.arange(Gi)[None, :, None] * S
            + np.arange(f)[None, None, :] * (Go * S)).reshape(-1)
    Hp_ext = max(Hp, int(rows.max()) + 1)
    Wp_ext = max(Wp, int(cols.max()) + 1)

    # NCHW -> NHWC, halo pad, and slot gather: one fused wrapper-side pass
    # producing the packed input (N, S*Hi, S*Gi, f*C).
    x_nhwc = jnp.transpose(x, (0, 2, 3, 1))
    x_pad = jnp.pad(
        x_nhwc,
        ((0, 0), (pad, Hp_ext - H - pad), (pad, Wp_ext - W - pad), (0, 0)))
    xi = x_pad
    if not np.array_equal(rows, np.arange(Hp_ext)):
        xi = jnp.take(xi, jnp.asarray(rows, dtype=jnp.int32), axis=1)
    if not np.array_equal(cols, np.arange(Wp_ext)):
        xi = jnp.take(xi, jnp.asarray(cols, dtype=jnp.int32), axis=2)
    xi = xi.reshape(N, S * Hi, S * Gi, L)

    # (C, K, K) -> (K*K, f*C): each tap's weights as one lane vector, tiled
    # across the f packed column phases.
    w_lanes = jnp.tile(jnp.transpose(w, (1, 2, 0)).reshape(K * K, C), (1, f))

    # Output H-tile: largest divisor of Ho keeping the accumulator <= ~32 vregs.
    th_cap = max(1, min(8, 32768 // max(1, Go * L)))
    TH = 1
    for cand in range(min(th_cap, Ho), 0, -1):
        if Ho % cand == 0:
            TH = cand
            break

    kernel = functools.partial(_dwconv_kernel, K=K, stride=S, Hi=Hi, Gi=Gi)

    out_packed = pl.pallas_call(
        kernel,
        out_shape=jax.ShapeDtypeStruct((N, Ho, Go, L), x.dtype),
        grid=(N, Ho // TH),
        in_specs=[
            # Full packed plane per batch element; index_map ignores the
            # H-tile index -> DMA'd once per batch element, VMEM-resident.
            pl.BlockSpec((1, S * Hi, S * Gi, L), lambda n, t: (n, 0, 0, 0)),
            # Weights: constant index_map -> resident for the whole grid.
            pl.BlockSpec((K * K, L), lambda n, t: (0, 0)),
        ],
        out_specs=pl.BlockSpec((1, TH, Go, L), lambda n, t: (n, t, 0, 0)),
        compiler_params=pltpu.CompilerParams(
            dimension_semantics=("parallel", "parallel"),
            vmem_limit_bytes=32 * 1024 * 1024,
        ),
    )(xi, w_lanes)

    # Unpack lanes: (N, Ho, Go, f*C) -> (N, Ho, Wo, C) with wo = p*Go + g,
    # then back to PyTorch NCHW.
    out = out_packed.reshape(N, Ho, Go, f, C)
    out = jnp.transpose(out, (0, 1, 3, 2, 4)).reshape(N, Ho, Wo, C)
    return jnp.transpose(out, (0, 3, 1, 2))


def _reference_depthwise_conv2d(x, w, *, stride=1):
    """Pure-JAX reference (lax conv with feature_group_count=C)."""
    C, K, _ = w.shape
    pad = (K - 1) // 2
    return jax.lax.conv_general_dilated(
        x,
        w[:, None, :, :],
        window_strides=(stride, stride),
        padding=[(pad, pad), (pad, pad)],
        dimension_numbers=("NCHW", "OIHW", "NCHW"),
        feature_group_count=C,
    )


if __name__ == "__main__":
    key = jax.random.PRNGKey(0)
    kx, kw_key = jax.random.split(key)

    # Module: DepthWiseConv(num_channels=4, kernel_size=3, stride=1)
    N, C, H, W, K = 2, 4, 16, 16, 3
    x = jax.random.normal(kx, (N, C, H, W), dtype=jnp.float32)
    weight = jax.random.normal(kw_key, (C, K, K), dtype=jnp.float32) * 0.1

    out = jax.block_until_ready(depthwise_conv2d(x, weight, stride=1))
    ref = jax.block_until_ready(_reference_depthwise_conv2d(x, weight, stride=1))
    assert out.shape == (N, C, H, W), out.shape
    assert jnp.allclose(out, ref, atol=1e-5, rtol=1e-5), float(
        jnp.max(jnp.abs(out - ref)))

    # stride=2 variant (exercises the parity-packed path flagged in review).
    out2 = jax.block_until_ready(depthwise_conv2d(x, weight, stride=2))
    ref2 = jax.block_until_ready(_reference_depthwise_conv2d(x, weight, stride=2))
    assert out2.shape == ref2.shape, (out2.shape, ref2.shape)
    assert jnp.allclose(out2, ref2, atol=1e-5, rtol=1e-5), float(
        jnp.max(jnp.abs(out2 - ref2)))

    print("KERNEL_OK")
</pallas_src>

<mosaic_0001>
module attributes {stable_mosaic.version = 11 : i64} {
  func.func @_dwconv_kernel(%arg0: i32, %arg1: i32, %arg2: memref<1x18x3x64xf32, #tpu.memory_space<vmem>>, %arg3: memref<9x64xf32, #tpu.memory_space<vmem>>, %arg4: memref<1x8x1x64xf32, #tpu.memory_space<vmem>>) attributes {dimension_semantics = [#tpu.dimension_semantics<parallel>, #tpu.dimension_semantics<parallel>], iteration_bounds = array<i64: 2, 2>, scalar_prefetch = 0 : i64, scratch_operands = 0 : i64, tpu.core_type = #tpu.core_type<tc>, window_params = [{transform_indices = @transform_0, window_bounds = array<i64: 1, 18, 3, 64>}, {pipeline_mode = #tpu.pipeline_mode<synchronous>, transform_indices = @transform_1, window_bounds = array<i64: 9, 64>}, {transform_indices = @transform_2, window_bounds = array<i64: 1, 8, 1, 64>}]} {
    %c8_i32 = arith.constant 8 : i32
    %0 = arith.muli %arg1, %c8_i32 : i32
    %1 = tpu.assume_multiple %0, 8 : i32
    %c0 = arith.constant 0 : index
    %c0_0 = arith.constant 0 : index
    %2 = vector.load %arg3[%c0, %c0_0] : memref<9x64xf32, #tpu.memory_space<vmem>>, vector<9x64xf32>
    %cst = arith.constant 0.000000e+00 : f32
    %3 = vector.broadcast %cst : f32 to vector<8x1x64xf32>
    %c0_i32 = arith.constant 0 : i32
    %4 = arith.addi %c0_i32, %1 : i32
    %c0_1 = arith.constant 0 : index
    %5 = arith.index_cast %4 : i32 to index
    %c0_2 = arith.constant 0 : index
    %c0_3 = arith.constant 0 : index
    %6 = vector.load %arg2[%c0_1, %5, %c0_2, %c0_3] : memref<1x18x3x64xf32, #tpu.memory_space<vmem>>, vector<1x8x1x64xf32>
    %7 = vector.shape_cast %6 : vector<1x8x1x64xf32> to vector<8x1x64xf32>
    %8 = vector.extract_strided_slice %2 {offsets = [0, 0], sizes = [1, 64], strides = [1, 1]} : vector<9x64xf32> to vector<1x64xf32>
    %9 = vector.shape_cast %8 : vector<1x64xf32> to vector<64xf32>
    %10 = vector.shape_cast %9 : vector<64xf32> to vector<1x1x64xf32>
    %11 = vector.broadcast %10 : vector<1x1x64xf32> to vector<8x1x64xf32>
    %12 = arith.mulf %7, %11 : vector<8x1x64xf32>
    %13 = arith.addf %3, %12 : vector<8x1x64xf32>
    %c0_i32_4 = arith.constant 0 : i32
    %14 = arith.addi %c0_i32_4, %1 : i32
    %c0_5 = arith.constant 0 : index
    %15 = arith.index_cast %14 : i32 to index
    %c1 = arith.constant 1 : index
    %c0_6 = arith.constant 0 : index
    %16 = vector.load %arg2[%c0_5, %15, %c1, %c0_6] : memref<1x18x3x64xf32, #tpu.memory_space<vmem>>, vector<1x8x1x64xf32>
    %17 = vector.shape_cast %16 : vector<1x8x1x64xf32> to vector<8x1x64xf32>
    %18 = vector.extract_strided_slice %2 {offsets = [1, 0], sizes = [1, 64], strides = [1, 1]} : vector<9x64xf32> to vector<1x64xf32>
    %19 = vector.shape_cast %18 : vector<1x64xf32> to vector<64xf32>
    %20 = vector.shape_cast %19 : vector<64xf32> to vector<1x1x64xf32>
    %21 = vector.broadcast %20 : vector<1x1x64xf32> to vector<8x1x64xf32>
    %22 = arith.mulf %17, %21 : vector<8x1x64xf32>
    %23 = arith.addf %13, %22 : vector<8x1x64xf32>
    %c0_i32_7 = arith.constant 0 : i32
    %24 = arith.addi %c0_i32_7, %1 : i32
    %c0_8 = arith.constant 0 : index
    %25 = arith.index_cast %24 : i32 to index
    %c2 = arith.constant 2 : index
    %c0_9 = arith.constant 0 : index
    %26 = vector.load %arg2[%c0_8, %25, %c2, %c0_9] : memref<1x18x3x64xf32, #tpu.memory_space<vmem>>, vector<1x8x1x64xf32>
    %27 = vector.shape_cast %26 : vector<1x8x1x64xf32> to vector<8x1x64xf32>
    %28 = vector.extract_strided_slice %2 {offsets = [2, 0], sizes = [1, 64], strides = [1, 1]} : vector<9x64xf32> to vector<1x64xf32>
    %29 = vector.shape_cast %28 : vector<1x64xf32> to vector<64xf32>
    %30 = vector.shape_cast %29 : vector<64xf32> to vector<1x1x64xf32>
    %31 = vector.broadcast %30 : vector<1x1x64xf32> to vector<8x1x64xf32>
    %32 = arith.mulf %27, %31 : vector<8x1x64xf32>
    %33 = arith.addf %23, %32 : vector<8x1x64xf32>
    %c1_i32 = arith.constant 1 : i32
    %34 = arith.addi %c1_i32, %1 : i32
    %c0_10 = arith.constant 0 : index
    %35 = arith.index_cast %34 : i32 to index
    %c0_11 = arith.constant 0 : index
    %c0_12 = arith.constant 0 : index
    %36 = vector.load %arg2[%c0_10, %35, %c0_11, %c0_12] : memref<1x18x3x64xf32, #tpu.memory_space<vmem>>, vector<1x8x1x64xf32>
    %37 = vector.shape_cast %36 : vector<1x8x1x64xf32> to vector<8x1x64xf32>
    %38 = vector.extract_strided_slice %2 {offsets = [3, 0], sizes = [1, 64], strides = [1, 1]} : vector<9x64xf32> to vector<1x64xf32>
    %39 = vector.shape_cast %38 : vector<1x64xf32> to vector<64xf32>
    %40 = vector.shape_cast %39 : vector<64xf32> to vector<1x1x64xf32>
    %41 = vector.broadcast %40 : vector<1x1x64xf32> to vector<8x1x64xf32>
    %42 = arith.mulf %37, %41 : vector<8x1x64xf32>
    %43 = arith.addf %33, %42 : vector<8x1x64xf32>
    %c1_i32_13 = arith.constant 1 : i32
    %44 = arith.addi %c1_i32_13, %1 : i32
    %c0_14 = arith.constant 0 : index
    %45 = arith.index_cast %44 : i32 to index
    %c1_15 = arith.constant 1 : index
    %c0_16 = arith.constant 0 : index
    %46 = vector.load %arg2[%c0_14, %45, %c1_15, %c0_16] : memref<1x18x3x64xf32, #tpu.memory_space<vmem>>, vector<1x8x1x64xf32>
    %47 = vector.shape_cast %46 : vector<1x8x1x64xf32> to vector<8x1x64xf32>
    %48 = vector.extract_strided_slice %2 {offsets = [4, 0], sizes = [1, 64], strides = [1, 1]} : vector<9x64xf32> to vector<1x64xf32>
    %49 = vector.shape_cast %48 : vector<1x64xf32> to vector<64xf32>
    %50 = vector.shape_cast %49 : vector<64xf32> to vector<1x1x64xf32>
    %51 = vector.broadcast %50 : vector<1x1x64xf32> to vector<8x1x64xf32>
    %52 = arith.mulf %47, %51 : vector<8x1x64xf32>
    %53 = arith.addf %43, %52 : vector<8x1x64xf32>
    %c1_i32_17 = arith.constant 1 : i32
    %54 = arith.addi %c1_i32_17, %1 : i32
    %c0_18 = arith.constant 0 : index
    %55 = arith.index_cast %54 : i32 to index
    %c2_19 = arith.constant 2 : index
    %c0_20 = arith.constant 0 : index
    %56 = vector.load %arg2[%c0_18, %55, %c2_19, %c0_20] : memref<1x18x3x64xf32, #tpu.memory_space<vmem>>, vector<1x8x1x64xf32>
    %57 = vector.shape_cast %56 : vector<1x8x1x64xf32> to vector<8x1x64xf32>
    %58 = vector.extract_strided_slice %2 {offsets = [5, 0], sizes = [1, 64], strides = [1, 1]} : vector<9x64xf32> to vector<1x64xf32>
    %59 = vector.shape_cast %58 : vector<1x64xf32> to vector<64xf32>
    %60 = vector.shape_cast %59 : vector<64xf32> to vector<1x1x64xf32>
    %61 = vector.broadcast %60 : vector<1x1x64xf32> to vector<8x1x64xf32>
    %62 = arith.mulf %57, %61 : vector<8x1x64xf32>
    %63 = arith.addf %53, %62 : vector<8x1x64xf32>
    %c2_i32 = arith.constant 2 : i32
    %64 = arith.addi %c2_i32, %1 : i32
    %c0_21 = arith.constant 0 : index
    %65 = arith.index_cast %64 : i32 to index
    %c0_22 = arith.constant 0 : index
    %c0_23 = arith.constant 0 : index
    %66 = vector.load %arg2[%c0_21, %65, %c0_22, %c0_23] : memref<1x18x3x64xf32, #tpu.memory_space<vmem>>, vector<1x8x1x64xf32>
    %67 = vector.shape_cast %66 : vector<1x8x1x64xf32> to vector<8x1x64xf32>
    %68 = vector.extract_strided_slice %2 {offsets = [6, 0], sizes = [1, 64], strides = [1, 1]} : vector<9x64xf32> to vector<1x64xf32>
    %69 = vector.shape_cast %68 : vector<1x64xf32> to vector<64xf32>
    %70 = vector.shape_cast %69 : vector<64xf32> to vector<1x1x64xf32>
    %71 = vector.broadcast %70 : vector<1x1x64xf32> to vector<8x1x64xf32>
    %72 = arith.mulf %67, %71 : vector<8x1x64xf32>
    %73 = arith.addf %63, %72 : vector<8x1x64xf32>
    %c2_i32_24 = arith.constant 2 : i32
    %74 = arith.addi %c2_i32_24, %1 : i32
    %c0_25 = arith.constant 0 : index
    %75 = arith.index_cast %74 : i32 to index
    %c1_26 = arith.constant 1 : index
    %c0_27 = arith.constant 0 : index
    %76 = vector.load %arg2[%c0_25, %75, %c1_26, %c0_27] : memref<1x18x3x64xf32, #tpu.memory_space<vmem>>, vector<1x8x1x64xf32>
    %77 = vector.shape_cast %76 : vector<1x8x1x64xf32> to vector<8x1x64xf32>
    %78 = vector.extract_strided_slice %2 {offsets = [7, 0], sizes = [1, 64], strides = [1, 1]} : vector<9x64xf32> to vector<1x64xf32>
    %79 = vector.shape_cast %78 : vector<1x64xf32> to vector<64xf32>
    %80 = vector.shape_cast %79 : vector<64xf32> to vector<1x1x64xf32>
    %81 = vector.broadcast %80 : vector<1x1x64xf32> to vector<8x1x64xf32>
    %82 = arith.mulf %77, %81 : vector<8x1x64xf32>
    %83 = arith.addf %73, %82 : vector<8x1x64xf32>
    %c2_i32_28 = arith.constant 2 : i32
    %84 = arith.addi %c2_i32_28, %1 : i32
    %c0_29 = arith.constant 0 : index
    %85 = arith.index_cast %84 : i32 to index
    %c2_30 = arith.constant 2 : index
    %c0_31 = arith.constant 0 : index
    %86 = vector.load %arg2[%c0_29, %85, %c2_30, %c0_31] : memref<1x18x3x64xf32, #tpu.memory_space<vmem>>, vector<1x8x1x64xf32>
    %87 = vector.shape_cast %86 : vector<1x8x1x64xf32> to vector<8x1x64xf32>
    %88 = vector.extract_strided_slice %2 {offsets = [8, 0], sizes = [1, 64], strides = [1, 1]} : vector<9x64xf32> to vector<1x64xf32>
    %89 = vector.shape_cast %88 : vector<1x64xf32> to vector<64xf32>
    %90 = vector.shape_cast %89 : vector<64xf32> to vector<1x1x64xf32>
    %91 = vector.broadcast %90 : vector<1x1x64xf32> to vector<8x1x64xf32>
    %92 = arith.mulf %87, %91 : vector<8x1x64xf32>
    %93 = arith.addf %83, %92 : vector<8x1x64xf32>
    %c0_32 = arith.constant 0 : index
    %c0_33 = arith.constant 0 : index
    %c0_34 = arith.constant 0 : index
    %c0_35 = arith.constant 0 : index
    %94 = vector.load %arg4[%c0_32, %c0_33, %c0_34, %c0_35] : memref<1x8x1x64xf32, #tpu.memory_space<vmem>>, vector<1x8x1x64xf32>
    %95 = vector.shape_cast %94 : vector<1x8x1x64xf32> to vector<8x1x64xf32>
    %96 = vector.shape_cast %93 : vector<8x1x64xf32> to vector<1x8x1x64xf32>
    tpu.vector_store %arg4[%c0_32, %c0_33, %c0_34, %c0_35], %96 {strides = array<i32>} : memref<1x8x1x64xf32, #tpu.memory_space<vmem>>, vector<1x8x1x64xf32>,
    return
  }
  func.func @transform_0(%arg0: i32, %arg1: i32) -> (i32, i32, i32, i32) {
    %c0_i32 = arith.constant 0 : i32
    %c0_i32_0 = arith.constant 0 : i32
    %c0_i32_1 = arith.constant 0 : i32
    %c0_i32_2 = arith.constant 0 : i32
    return %arg0, %c0_i32, %c0_i32_0, %c0_i32_1 : i32, i32, i32, i32
  }
  func.func @transform_1(%arg0: i32, %arg1: i32) -> (i32, i32) {
    %c0_i32 = arith.constant 0 : i32
    %c0_i32_0 = arith.constant 0 : i32
    %c0_i32_1 = arith.constant 0 : i32
    return %c0_i32, %c0_i32_0 : i32, i32
  }
  func.func @transform_2(%arg0: i32, %arg1: i32) -> (i32, i32, i32, i32) {
    %c0_i32 = arith.constant 0 : i32
    %c0_i32_0 = arith.constant 0 : i32
    %c0_i32_1 = arith.constant 0 : i32
    return %arg0, %arg1, %c0_i32, %c0_i32_0 : i32, i32, i32, i32
  }
}

</mosaic_0001>

<llo_original>
// kernel: depthwise_conv2d.1
$region0: #{depthwise_conv2d.1}
  #allocation0 [shape = 'u32[]', space=smem, size = 0x4, offset = 0x4, fixed_abs, tag = 'smem constant byte address 0x4 - core index']
  #allocation1 [shape = 'u32[144,128]{1,0:T(1,128)}', space=vmem, size = 0x12000, scoped, tag = 'internal scratch']
  %s0 = inlined_call_operand.vmem [shape: f32[2,18,3,64], index: 0, kind: input, shape index: {}]
  %s1 = inlined_call_operand.vmem [shape: f32[9,64], index: 1, kind: input, shape index: {}]
  %s2 = inlined_call_operand.vmem [shape: f32[2,16,1,64], index: 2, kind: output, shape index: {}]
  %s3 = sld [smem:[#allocation0]]
  $region41: #{depthwise_conv2d.1} parent=0
    _
  %s5 = ssub.s32 1, %s3
  %s6 = scalar_select 0, %s5, %s3
  loop: start=0, step=1, limit=6
  $region2: #{depthwise_conv2d.1} parent=0 // loop_pre_header
    _
  $region3: #{depthwise_conv2d.1} parent=0 // loop_header
    %s8 = sphi 0, %s12
    %p9 = scmp.ge.s32.totalorder %s8, 6
    %s15 = sphi 0, %s27
    %s16 = sphi 0, %s23
    %s17 = sphi 0, %s15
    %s18 = sphi 0, %s16
    %s19 = sphi 0, %s17
    %s20 = sphi 0, %s18
    %s30 = sphi 0, %s32
    %s33 = sphi 0, %s30
    %s34 = sphi 0, %s33
    %s50 = sphi 0, %s34
    %s54 = sphi 0, %s54
    %s56 = sphi 0, %s54
    %s57 = sphi 0, %s56
    %s71 = sphi 0, %s57
    %s79 = sphi 0, %s81
    %s82 = sphi 0, %s79
    %s83 = sphi 0, %s82
    %s99 = sphi 0, %s83
  $region4: #{depthwise_conv2d.1} parent=0 // loop_header_branch
    %11 = sbr.rel (%p9) target = $region8
  $region5: #{depthwise_conv2d.1} parent=0 // loop_body
    %s13 = ssub.s32 %s8, 1
    %s14 = ssub.s32 %s8, 2
    %s21 = sadd.s32 1, %s16
    %p22 = scmp.ge.s32.totalorder %s21, 2
    %s23 = scalar_select %p22, 0, %s21
    %s24 = sadd.s32 1, %s15
    %s25 = scalar_select %p22, %s24, %s15
    %p26 = scmp.ge.s32.totalorder %s25, 2
    %s27 = scalar_select %p26, 0, %s25
    %s28 = ssub.s32 %s15, %s27
    %p29 = scmp.eq.s32.totalorder %s28, 0
    %s31 = sadd.s32 %s30, 1
    %s32 = scalar_select %p29, %s30, %s31
    %p35 = pneg %p29
    %p36 = scmp.eq.s32.totalorder %s8, 3
    %p37 = por %p35, %p36
    %p38 = scmp.ne.s32.totalorder %s30, %s33
    %p39 = scmp.eq.s32.totalorder %s8, 0
    %p40 = por %p38, %p39
    %p41 = scmp.ne.s32.totalorder %s30, %s33
    %p42 = scmp.eq.s32.totalorder %s13, 3
    %p43 = por %p41, %p42
    %p44 = scmp.ne.s32.totalorder %s33, %s34
    %p45 = scmp.eq.s32.totalorder %s13, 0
    %p46 = por %p44, %p45
    %p47 = scmp.ne.s32.totalorder %s33, %s34
    %p48 = scmp.eq.s32.totalorder %s14, 3
    %p49 = por %p47, %p48
    %p51 = scmp.ne.s32.totalorder %s34, %s50
    %p52 = scmp.eq.s32.totalorder %s14, 0
    %p53 = por %p51, %p52
    %s55 = sadd.s32 %s54, 1
    %p58 = scmp.eq.s32.totalorder %s8, 3
    %p59 = scmp.ne.s32.totalorder %s54, %s56
    %p60 = scmp.eq.s32.totalorder %s8, 0
    %p61 = por %p59, %p60
    %p62 = scmp.ne.s32.totalorder %s54, %s56
    %p63 = scmp.eq.s32.totalorder %s13, 3
    %p64 = por %p62, %p63
    %p65 = scmp.ne.s32.totalorder %s56, %s57
    %p66 = scmp.eq.s32.totalorder %s13, 0
    %p67 = por %p65, %p66
    %p68 = scmp.ne.s32.totalorder %s56, %s57
    %p69 = scmp.eq.s32.totalorder %s14, 3
    %p70 = por %p68, %p69
    %p72 = scmp.ne.s32.totalorder %s57, %s71
    %p73 = scmp.eq.s32.totalorder %s14, 0
    %p74 = por %p72, %p73
    %s75 = ssub.s32 %s15, %s27
    %s76 = ssub.s32 %s16, %s23
    %s77 = sor.u32 %s75, %s76
    %p78 = scmp.eq.s32.totalorder %s77, 0
    %s80 = sadd.s32 %s79, 1
    %s81 = scalar_select %p78, %s79, %s80
    %p84 = pneg %p78
    %p85 = scmp.eq.s32.totalorder %s8, 3
    %p86 = por %p84, %p85
    %p87 = scmp.ne.s32.totalorder %s79, %s82
    %p88 = scmp.eq.s32.totalorder %s8, 0
    %p89 = por %p87, %p88
    %p90 = scmp.ne.s32.totalorder %s79, %s82
    %p91 = scmp.eq.s32.totalorder %s13, 3
    %p92 = por %p90, %p91
    %p93 = scmp.ne.s32.totalorder %s82, %s83
    %p94 = scmp.eq.s32.totalorder %s13, 0
    %p95 = por %p93, %p94
    %p96 = scmp.ne.s32.totalorder %s82, %s83
    %p97 = scmp.eq.s32.totalorder %s14, 3
    %p98 = por %p96, %p97
    %p100 = scmp.ne.s32.totalorder %s83, %s99
    %p101 = scmp.eq.s32.totalorder %s14, 0
    %p102 = por %p100, %p101
    %p103 = scmp.le.s32.totalorder 1, %s8
    %p104 = scmp.lt.s32.totalorder %s8, 5
    %p105 = pnand %p103, %p104
    %p106 = pneg %p105
    // Predicated region
    $region9: #{depthwise_conv2d.1} parent=5 // pred_check
      _
    $region10: #{depthwise_conv2d.1} parent=5 // pred_check_branch
      %108 = sbr.rel (%p105) target = $region12
    $region11: #{depthwise_conv2d.1} parent=5 // pred_region
      %s109 = ssub.s32 %s8, 1
      // Predicated region
      $region13: #{depthwise_conv2d.1} parent=11 // pred_check
        %p110 = pneg %p67
      $region14: #{depthwise_conv2d.1} parent=11 // pred_check_branch
        %112 = sbr.rel (%p110) target = $region16
      $region15: #{depthwise_conv2d.1} parent=11 // pred_region
        _
      $region16: #{depthwise_conv2d.1} parent=11 // pred_fallthru
        _
    $region12: #{depthwise_conv2d.1} parent=5 // pred_fallthru
      _
    %p113 = scmp.lt.s32.totalorder %s8, 4
    // Predicated region
    $region17: #{depthwise_conv2d.1} parent=5 // pred_check
      %p114 = pneg %p113
    $region18: #{depthwise_conv2d.1} parent=5 // pred_check_branch
      %116 = sbr.rel (%p114) target = $region20
    $region19: #{depthwise_conv2d.1} parent=5 // pred_region
      // Predicated region
      $region21: #{depthwise_conv2d.1} parent=19 // pred_check
        %p117 = pneg %p40
      $region22: #{depthwise_conv2d.1} parent=19 // pred_check_branch
        %119 = sbr.rel (%p117) target = $region24
      $region23: #{depthwise_conv2d.1} parent=19 // pred_region
        %p120 = scmp.lt.s32.totalorder %s15, 1
        %s121 = scalar_select %p120, %s15, 1
        %s122 = smul.addr %s121, 18
        %s123 = smul.addr %s122, 4
        %s124 = scalar_lea.vmem %s0, %s123
      $region24: #{depthwise_conv2d.1} parent=19 // pred_fallthru
        _
    $region20: #{depthwise_conv2d.1} parent=5 // pred_fallthru
      _
    %p125 = scmp.le.s32.totalorder 1, %s8
    %p126 = scmp.lt.s32.totalorder %s8, 5
    %p127 = pnand %p125, %p126
    %p128 = pneg %p127
    // Predicated region
    $region25: #{depthwise_conv2d.1} parent=5 // pred_check
      _
    $region26: #{depthwise_conv2d.1} parent=5 // pred_check_branch
      %130 = sbr.rel (%p127) target = $region28
    $region27: #{depthwise_conv2d.1} parent=5 // pred_region
      %s131 = ssub.s32 %s8, 1
      %p132 = scmp.lt.s32.totalorder %s17, 1
      %s133 = scalar_select %p132, %s17, 1
      %s134 = smul.addr %s133, 18
      %s135 = smul.addr %s134, 4
      %s136 = scalar_lea.vmem %s0, %s135
      %p137 = pneg %p46
      %p138 = pneg %p43
      %p139 = pneg %p67
      %p140 = pneg %p64
      %p141 = pneg %p95
      %p142 = pneg %p92
      %s143 = smul.u32 8, %s18
      %p144 = scmp.lt.s32.totalorder %s17, 1
      %s145 = scalar_select %p144, %s17, 1
      %p146 = scmp.lt.s32.totalorder %s143, 15
      %s147 = scalar_select %p146, %s143, 15
      %s148 = smul.addr %s145, 16
      %s149 = sadd.s32 %s147, %s148
      %s150 = scalar_lea.vmem %s2, %s149
      %p151 = scmp.lt.s32.totalorder %s17, 1
      %s152 = scalar_select %p151, %s17, 1
      %s153 = smul.addr %s152, 18
      %s154 = smul.addr %s153, 4
      %s155 = scalar_lea.vmem %s0, %s154
      %s156 = smul.u32 8, %s18
      %p157 = scmp.lt.s32.totalorder %s17, 1
      %s158 = scalar_select %p157, %s17, 1
      %p159 = scmp.lt.s32.totalorder %s156, 15
      %s160 = scalar_select %p159, %s156, 15
      %s161 = smul.addr %s158, 16
      %s162 = sadd.s32 %s160, %s161
      %s163 = scalar_lea.vmem %s2, %s162
      %s164 = smul.u32 8, %s18
      %s165 = smul.u32 %s18, 8
      %v166 = vld [vmem:[%s1] sm:$0xff]
      %v167 = vld [vmem:[%s1 + $0x8] sm:$0x1]
      %s168 = smul.u32 %s165, 4
      %s169 = scalar_lea.vmem %s155, %s168
      %v170 = vld [vmem:[%s169] sm:$0x1]
      %v171 = vld [vmem:[%s169 + $0x4] sm:$0x1]
      %v172 = vld [vmem:[%s169 + $0x8] sm:$0x1]
      %v173 = vld [vmem:[%s169 + $0xc] sm:$0x1]
      %v174 = vld [vmem:[%s169 + $0x10] sm:$0x1]
      %v175 = vld [vmem:[%s169 + $0x14] sm:$0x1]
      %v176 = vld [vmem:[%s169 + $0x18] sm:$0x1]
      %v177 = vld [vmem:[%s169 + $0x1c] sm:$0x1]
      %v178 = vmul.f32 %v170, %v166
      %v179 = vmul.f32 %v171, %v166
      %v180 = vmul.f32 %v172, %v166
      %v181 = vmul.f32 %v173, %v166
      %v182 = vmul.f32 %v174, %v166
      %v183 = vmul.f32 %v175, %v166
      %v184 = vmul.f32 %v176, %v166
      %v185 = vmul.f32 %v177, %v166
      %v186 = vadd.f32 %v178, 0.0
      %v187 = vadd.f32 %v179, 0.0
      %v188 = vadd.f32 %v180, 0.0
      %v189 = vadd.f32 %v181, 0.0
      %v190 = vadd.f32 %v182, 0.0
      %v191 = vadd.f32 %v183, 0.0
      %v192 = vadd.f32 %v184, 0.0
      %v193 = vadd.f32 %v185, 0.0
      %v194 = vld [vmem:[%s169 + $0x1] sm:$0x1]
      %v195 = vld [vmem:[%s169 + $0x5] sm:$0x1]
      %v196 = vld [vmem:[%s169 + $0x9] sm:$0x1]
      %v197 = vld [vmem:[%s169 + $0xd] sm:$0x1]
      %v198 = vld [vmem:[%s169 + $0x11] sm:$0x1]
      %v199 = vld [vmem:[%s169 + $0x15] sm:$0x1]
      %v200 = vld [vmem:[%s169 + $0x19] sm:$0x1]
      %v201 = vld [vmem:[%s169 + $0x1d] sm:$0x1]
      %v203 = vrot.slane %v166, 1
      %v205 = vmul.f32 %v194, %v203
      %v206 = vmul.f32 %v195, %v203
      %v207 = vmul.f32 %v196, %v203
      %v208 = vmul.f32 %v197, %v203
      %v209 = vmul.f32 %v198, %v203
      %v210 = vmul.f32 %v199, %v203
      %v211 = vmul.f32 %v200, %v203
      %v212 = vmul.f32 %v201, %v203
      %v213 = vadd.f32 %v186, %v205
      %v214 = vadd.f32 %v187, %v206
      %v215 = vadd.f32 %v188, %v207
      %v216 = vadd.f32 %v189, %v208
      %v217 = vadd.f32 %v190, %v209
      %v218 = vadd.f32 %v191, %v210
      %v219 = vadd.f32 %v192, %v211
      %v220 = vadd.f32 %v193, %v212
      %v221 = vld [vmem:[%s169 + $0x2] sm:$0x1]
      %v222 = vld [vmem:[%s169 + $0x6] sm:$0x1]
      %v223 = vld [vmem:[%s169 + $0xa] sm:$0x1]
      %v224 = vld [vmem:[%s169 + $0xe] sm:$0x1]
      %v225 = vld [vmem:[%s169 + $0x12] sm:$0x1]
      %v226 = vld [vmem:[%s169 + $0x16] sm:$0x1]
      %v227 = vld [vmem:[%s169 + $0x1a] sm:$0x1]
      %v228 = vld [vmem:[%s169 + $0x1e] sm:$0x1]
      %v229 = vrot.slane %v166, 2
      %v231 = vmul.f32 %v221, %v229
      %v232 = vmul.f32 %v222, %v229
      %v233 = vmul.f32 %v223, %v229
      %v234 = vmul.f32 %v224, %v229
      %v235 = vmul.f32 %v225, %v229
      %v236 = vmul.f32 %v226, %v229
      %v237 = vmul.f32 %v227, %v229
      %v238 = vmul.f32 %v228, %v229
      %v239 = vadd.f32 %v213, %v231
      %v240 = vadd.f32 %v214, %v232
      %v241 = vadd.f32 %v215, %v233
      %v242 = vadd.f32 %v216, %v234
      %v243 = vadd.f32 %v217, %v235
      %v244 = vadd.f32 %v218, %v236
      %v245 = vadd.f32 %v219, %v237
      %v246 = vadd.f32 %v220, %v238
      %s247 = sadd.s32 %s165, 1
      %s248 = smul.u32 %s247, 4
      %s249 = scalar_lea.vmem %s155, %s248
      %v250 = vld [vmem:[%s249] sm:$0x1]
      %v251 = vld [vmem:[%s249 + $0x4] sm:$0x1]
      %v252 = vld [vmem:[%s249 + $0x8] sm:$0x1]
      %v253 = vld [vmem:[%s249 + $0xc] sm:$0x1]
      %v254 = vld [vmem:[%s249 + $0x10] sm:$0x1]
      %v255 = vld [vmem:[%s249 + $0x14] sm:$0x1]
      %v256 = vld [vmem:[%s249 + $0x18] sm:$0x1]
      %v257 = vld [vmem:[%s249 + $0x1c] sm:$0x1]
      %v258 = vrot.slane %v166, 3
      %v260 = vmul.f32 %v250, %v258
      %v261 = vmul.f32 %v251, %v258
      %v262 = vmul.f32 %v252, %v258
      %v263 = vmul.f32 %v253, %v258
      %v264 = vmul.f32 %v254, %v258
      %v265 = vmul.f32 %v255, %v258
      %v266 = vmul.f32 %v256, %v258
      %v267 = vmul.f32 %v257, %v258
      %v268 = vadd.f32 %v239, %v260
      %v269 = vadd.f32 %v240, %v261
      %v270 = vadd.f32 %v241, %v262
      %v271 = vadd.f32 %v242, %v263
      %v272 = vadd.f32 %v243, %v264
      %v273 = vadd.f32 %v244, %v265
      %v274 = vadd.f32 %v245, %v266
      %v275 = vadd.f32 %v246, %v267
      %v276 = vld [vmem:[%s249 + $0x1] sm:$0x1]
      %v277 = vld [vmem:[%s249 + $0x5] sm:$0x1]
      %v278 = vld [vmem:[%s249 + $0x9] sm:$0x1]
      %v279 = vld [vmem:[%s249 + $0xd] sm:$0x1]
      %v280 = vld [vmem:[%s249 + $0x11] sm:$0x1]
      %v281 = vld [vmem:[%s249 + $0x15] sm:$0x1]
      %v282 = vld [vmem:[%s249 + $0x19] sm:$0x1]
      %v283 = vld [vmem:[%s249 + $0x1d] sm:$0x1]
      %v284 = vrot.slane %v166, 4
      %v286 = vmul.f32 %v276, %v284
      %v287 = vmul.f32 %v277, %v284
      %v288 = vmul.f32 %v278, %v284
      %v289 = vmul.f32 %v279, %v284
      %v290 = vmul.f32 %v280, %v284
      %v291 = vmul.f32 %v281, %v284
      %v292 = vmul.f32 %v282, %v284
      %v293 = vmul.f32 %v283, %v284
      %v294 = vadd.f32 %v268, %v286
      %v295 = vadd.f32 %v269, %v287
      %v296 = vadd.f32 %v270, %v288
      %v297 = vadd.f32 %v271, %v289
      %v298 = vadd.f32 %v272, %v290
      %v299 = vadd.f32 %v273, %v291
      %v300 = vadd.f32 %v274, %v292
      %v301 = vadd.f32 %v275, %v293
      %v302 = vld [vmem:[%s249 + $0x2] sm:$0x1]
      %v303 = vld [vmem:[%s249 + $0x6] sm:$0x1]
      %v304 = vld [vmem:[%s249 + $0xa] sm:$0x1]
      %v305 = vld [vmem:[%s249 + $0xe] sm:$0x1]
      %v306 = vld [vmem:[%s249 + $0x12] sm:$0x1]
      %v307 = vld [vmem:[%s249 + $0x16] sm:$0x1]
      %v308 = vld [vmem:[%s249 + $0x1a] sm:$0x1]
      %v309 = vld [vmem:[%s249 + $0x1e] sm:$0x1]
      %v310 = vrot.slane %v166, 5
      %v312 = vmul.f32 %v302, %v310
      %v313 = vmul.f32 %v303, %v310
      %v314 = vmul.f32 %v304, %v310
      %v315 = vmul.f32 %v305, %v310
      %v316 = vmul.f32 %v306, %v310
      %v317 = vmul.f32 %v307, %v310
      %v318 = vmul.f32 %v308, %v310
      %v319 = vmul.f32 %v309, %v310
      %v320 = vadd.f32 %v294, %v312
      %v321 = vadd.f32 %v295, %v313
      %v322 = vadd.f32 %v296, %v314
      %v323 = vadd.f32 %v297, %v315
      %v324 = vadd.f32 %v298, %v316
      %v325 = vadd.f32 %v299, %v317
      %v326 = vadd.f32 %v300, %v318
      %v327 = vadd.f32 %v301, %v319
      %s328 = sadd.s32 %s165, 2
      %s329 = smul.u32 %s328, 4
      %s330 = scalar_lea.vmem %s155, %s329
      %v331 = vld [vmem:[%s330] sm:$0x1]
      %v332 = vld [vmem:[%s330 + $0x4] sm:$0x1]
      %v333 = vld [vmem:[%s330 + $0x8] sm:$0x1]
      %v334 = vld [vmem:[%s330 + $0xc] sm:$0x1]
      %v335 = vld [vmem:[%s330 + $0x10] sm:$0x1]
      %v336 = vld [vmem:[%s330 + $0x14] sm:$0x1]
      %v337 = vld [vmem:[%s330 + $0x18] sm:$0x1]
      %v338 = vld [vmem:[%s330 + $0x1c] sm:$0x1]
      %v339 = vrot.slane %v166, 6
      %v341 = vmul.f32 %v331, %v339
      %v342 = vmul.f32 %v332, %v339
      %v343 = vmul.f32 %v333, %v339
      %v344 = vmul.f32 %v334, %v339
      %v345 = vmul.f32 %v335, %v339
      %v346 = vmul.f32 %v336, %v339
      %v347 = vmul.f32 %v337, %v339
      %v348 = vmul.f32 %v338, %v339
      %v349 = vadd.f32 %v320, %v341
      %v350 = vadd.f32 %v321, %v342
      %v351 = vadd.f32 %v322, %v343
      %v352 = vadd.f32 %v323, %v344
      %v353 = vadd.f32 %v324, %v345
      %v354 = vadd.f32 %v325, %v346
      %v355 = vadd.f32 %v326, %v347
      %v356 = vadd.f32 %v327, %v348
      %v357 = vld [vmem:[%s330 + $0x1] sm:$0x1]
      %v358 = vld [vmem:[%s330 + $0x5] sm:$0x1]
      %v359 = vld [vmem:[%s330 + $0x9] sm:$0x1]
      %v360 = vld [vmem:[%s330 + $0xd] sm:$0x1]
      %v361 = vld [vmem:[%s330 + $0x11] sm:$0x1]
      %v362 = vld [vmem:[%s330 + $0x15] sm:$0x1]
      %v363 = vld [vmem:[%s330 + $0x19] sm:$0x1]
      %v364 = vld [vmem:[%s330 + $0x1d] sm:$0x1]
      %v365 = vrot.slane %v166, 7
      %v367 = vmul.f32 %v357, %v365
      %v368 = vmul.f32 %v358, %v365
      %v369 = vmul.f32 %v359, %v365
      %v370 = vmul.f32 %v360, %v365
      %v371 = vmul.f32 %v361, %v365
      %v372 = vmul.f32 %v362, %v365
      %v373 = vmul.f32 %v363, %v365
      %v374 = vmul.f32 %v364, %v365
      %v375 = vadd.f32 %v349, %v367
      %v376 = vadd.f32 %v350, %v368
      %v377 = vadd.f32 %v351, %v369
      %v378 = vadd.f32 %v352, %v370
      %v379 = vadd.f32 %v353, %v371
      %v380 = vadd.f32 %v354, %v372
      %v381 = vadd.f32 %v355, %v373
      %v382 = vadd.f32 %v356, %v374
      %v383 = vld [vmem:[%s330 + $0x2] sm:$0x1]
      %v384 = vld [vmem:[%s330 + $0x6] sm:$0x1]
      %v385 = vld [vmem:[%s330 + $0xa] sm:$0x1]
      %v386 = vld [vmem:[%s330 + $0xe] sm:$0x1]
      %v387 = vld [vmem:[%s330 + $0x12] sm:$0x1]
      %v388 = vld [vmem:[%s330 + $0x16] sm:$0x1]
      %v389 = vld [vmem:[%s330 + $0x1a] sm:$0x1]
      %v390 = vld [vmem:[%s330 + $0x1e] sm:$0x1]
      %v391 = vmul.f32 %v383, %v167
      %v392 = vmul.f32 %v384, %v167
      %v393 = vmul.f32 %v385, %v167
      %v394 = vmul.f32 %v386, %v167
      %v395 = vmul.f32 %v387, %v167
      %v396 = vmul.f32 %v388, %v167
      %v397 = vmul.f32 %v389, %v167
      %v398 = vmul.f32 %v390, %v167
      %v399 = vadd.f32 %v375, %v391
      %v400 = vadd.f32 %v376, %v392
      %v401 = vadd.f32 %v377, %v393
      %v402 = vadd.f32 %v378, %v394
      %v403 = vadd.f32 %v379, %v395
      %v404 = vadd.f32 %v380, %v396
      %v405 = vadd.f32 %v381, %v397
      %v406 = vadd.f32 %v382, %v398
      %vm407 = vcmask 516096
      %408 = vst.msk [vmem:[%s163] sm:$0x1] %vm407, %v399
      %409 = vst.msk [vmem:[%s163 + $0x1] sm:$0x1] %vm407, %v400
      %410 = vst.msk [vmem:[%s163 + $0x2] sm:$0x1] %vm407, %v401
      %411 = vst.msk [vmem:[%s163 + $0x3] sm:$0x1] %vm407, %v402
      %412 = vst.msk [vmem:[%s163 + $0x4] sm:$0x1] %vm407, %v403
      %413 = vst.msk [vmem:[%s163 + $0x5] sm:$0x1] %vm407, %v404
      %414 = vst.msk [vmem:[%s163 + $0x6] sm:$0x1] %vm407, %v405
      %415 = vst.msk [vmem:[%s163 + $0x7] sm:$0x1] %vm407, %v406
      %s416 = smul.u32 8, %s18
      %p417 = scmp.lt.s32.totalorder %s17, 1
      %s418 = scalar_select %p417, %s17, 1
      %p419 = scmp.lt.s32.totalorder %s416, 15
      %s420 = scalar_select %p419, %s416, 15
      %s421 = smul.addr %s418, 16
      %s422 = sadd.s32 %s420, %s421
      %s423 = scalar_lea.vmem %s2, %s422
      // Predicated region
      $region29: #{depthwise_conv2d.1} parent=27 // pred_check
        %p424 = pneg %p92
      $region30: #{depthwise_conv2d.1} parent=27 // pred_check_branch
        %426 = sbr.rel (%p424) target = $region32
      $region31: #{depthwise_conv2d.1} parent=27 // pred_region
        %s427 = smul.u32 8, %s18
      $region32: #{depthwise_conv2d.1} parent=27 // pred_fallthru
        _
    $region28: #{depthwise_conv2d.1} parent=5 // pred_fallthru
      _
    %p428 = scmp.le.s32.totalorder 2, %s8
    // Predicated region
    $region33: #{depthwise_conv2d.1} parent=5 // pred_check
      %p429 = pneg %p428
    $region34: #{depthwise_conv2d.1} parent=5 // pred_check_branch
      %431 = sbr.rel (%p429) target = $region36
    $region35: #{depthwise_conv2d.1} parent=5 // pred_region
      %s432 = ssub.s32 %s8, 2
      // Predicated region
      $region37: #{depthwise_conv2d.1} parent=35 // pred_check
        %p433 = pneg %p98
      $region38: #{depthwise_conv2d.1} parent=35 // pred_check_branch
        %435 = sbr.rel (%p433) target = $region40
      $region39: #{depthwise_conv2d.1} parent=35 // pred_region
        %s436 = smul.u32 8, %s20
        %p437 = scmp.lt.s32.totalorder %s19, 1
        %s438 = scalar_select %p437, %s19, 1
        %p439 = scmp.lt.s32.totalorder %s436, 15
        %s440 = scalar_select %p439, %s436, 15
        %s441 = smul.addr %s438, 16
        %s442 = sadd.s32 %s440, %s441
        %s443 = scalar_lea.vmem %s2, %s442
      $region40: #{depthwise_conv2d.1} parent=35 // pred_fallthru
        _
    $region36: #{depthwise_conv2d.1} parent=5 // pred_fallthru
      _
  $region6: #{depthwise_conv2d.1} parent=0 // loop_footer
    %s12 = sadd.s32 1, %s8
  $region7: #{depthwise_conv2d.1} parent=0 // loop_footer_branch
    %7 = sbr.rel target = $region3
  $region8: #{depthwise_conv2d.1} parent=0 // loop_exit
    _

</llo_original>
